<compile_context>
chip_gen: v7x
topology: tpu7x:2x2x1
jax: 0.10.0
libtpu: 0.0.40
codegen_flags: <defaults>
</compile_context>

<pallas_src>
import jax
import jax.numpy as jnp
from jax.experimental import pallas as pl
from jax.experimental.pallas import tpu as pltpu


def _wgan_loss_kernel(signs_ref, x_ref, w1_ref, b1_ref, w2t_ref, out_ref, acc_ref):
    """One stacked discriminator pass + signed mean-difference reduction.

    signs_ref : [TB, 1]   +1/B for fake rows, -1/B for real rows, 0 for padding
    x_ref     : [TB, TK]  bf16 stacked (fake; real) samples, K-tiled
    w1_ref    : [TK, H]   bf16 first linear weight, K-tiled
    b1_ref    : [1, H]    f32 first linear bias
    w2t_ref   : [1, H]    f32 second linear weight, pre-transposed (lane dense)
    out_ref   : [1, 1]    f32 scalar loss accumulator (shared across the grid)
    acc_ref   : [TB, H]   f32 scratch: x @ w1 partial sums over K
    """
    i = pl.program_id(0)
    k = pl.program_id(1)
    nk = pl.num_programs(1)

    @pl.when(jnp.logical_and(i == 0, k == 0))
    def _():
        out_ref[...] = jnp.zeros_like(out_ref)

    @pl.when(k == 0)
    def _():
        acc_ref[...] = jnp.zeros_like(acc_ref)

    # MXU: bf16 x bf16 -> f32 accumulation over the K (feature) tiles.
    acc_ref[...] += jnp.dot(x_ref[...], w1_ref[...],
                            preferred_element_type=jnp.float32)

    @pl.when(k == nk - 1)
    def _():
        # Bias + LeakyReLU(0.2) applied once, after the K reduction completes.
        h = acc_ref[...] + b1_ref[...]
        h = jnp.where(h > 0, h, 0.2 * h)
        # Signed, 1/B-scaled batch reduction; (h @ w2) folded into a cheap
        # elementwise-mul + cross-lane reduce against the lane-dense w2^T row.
        v = jnp.sum(signs_ref[...] * h, axis=0, keepdims=True)   # [1, H]
        contrib = jnp.sum(v * w2t_ref[...])
        out_ref[...] = out_ref[...] + contrib
        # b2 is intentionally omitted: it cancels in mean(D(fake)) - mean(D(real)).


def _round_up(a, m):
    return (a + m - 1) // m * m


def wasserstein_loss_gan(fake_nchw, real_nchw, params):
    """Wasserstein discriminator loss. fake/real are NCHW; params are the
    synthetic discriminator's weights (w1, b1, w2, b2)."""
    w1, b1, w2, b2 = params  # b2 unused on purpose (cancels in the difference)
    del b2
    B = fake_nchw.shape[0]
    D = fake_nchw.shape[1] * fake_nchw.shape[2] * fake_nchw.shape[3]
    H = w1.shape[1]

    # Stack fake and real -> one discriminator pass; bf16 halves HBM traffic.
    x = jnp.concatenate(
        [fake_nchw.reshape(B, D), real_nchw.reshape(B, D)], axis=0
    ).astype(jnp.bfloat16)
    signs = jnp.concatenate(
        [jnp.full((B, 1), 1.0 / B, dtype=jnp.float32),
         jnp.full((B, 1), -1.0 / B, dtype=jnp.float32)], axis=0)

    # Tile sizes: row tile multiple of 16 (bf16 sublane packing), feature tile
    # multiple of 128 lanes. Small enough to fit comfortably in VMEM on
    # v5e/v6e (128 MiB) and v7x (64 MiB) with double buffering.
    TB = min(_round_up(2 * B, 16), 512)
    N = _round_up(2 * B, TB)
    TK = min(_round_up(D, 128), 512)
    Dp = _round_up(D, TK)

    if N != 2 * B:
        x = jnp.pad(x, ((0, N - 2 * B), (0, 0)))
        signs = jnp.pad(signs, ((0, N - 2 * B), (0, 0)))  # padded rows: sign 0
    if Dp != D:
        x = jnp.pad(x, ((0, 0), (0, Dp - D)))

    w1p = w1.astype(jnp.bfloat16)
    if Dp != D:
        w1p = jnp.pad(w1p, ((0, Dp - D), (0, 0)))  # zero rows -> no contribution
    b1_2d = b1.reshape(1, H).astype(jnp.float32)
    w2t = w2.reshape(1, H).astype(jnp.float32)     # pre-transposed, lane dense

    nbt, nkt = N // TB, Dp // TK

    out = pl.pallas_call(
        _wgan_loss_kernel,
        out_shape=jax.ShapeDtypeStruct((1, 1), jnp.float32),
        grid_spec=pltpu.PrefetchScalarGridSpec(
            num_scalar_prefetch=0,
            grid=(nbt, nkt),  # K (reduction) axis last -> inner loop
            in_specs=[
                pl.BlockSpec((TB, 1), lambda i, k: (i, 0)),   # signs
                pl.BlockSpec((TB, TK), lambda i, k: (i, k)),  # stacked samples
                pl.BlockSpec((TK, H), lambda i, k: (k, 0)),   # w1 (K-tiled)
                pl.BlockSpec((1, H), lambda i, k: (0, 0)),    # b1 (resident)
                pl.BlockSpec((1, H), lambda i, k: (0, 0)),    # w2^T (resident)
            ],
            out_specs=pl.BlockSpec((1, 1), lambda i, k: (0, 0)),
            scratch_shapes=[pltpu.VMEM((TB, H), jnp.float32)],
        ),
        compiler_params=pltpu.CompilerParams(
            # Output is a single shared accumulator block -> both axes arbitrary.
            dimension_semantics=("arbitrary", "arbitrary")),
    )(signs, x, w1p, b1_2d, w2t)
    return out[0, 0]


def _reference_loss(fake_nchw, real_nchw, params):
    """Pure-JAX f32 reference (includes b2, which must cancel)."""
    w1, b1, w2, b2 = params
    B = fake_nchw.shape[0]

    def disc(x):
        h = x.reshape(B, -1).astype(jnp.float32) @ w1 + b1
        h = jnp.where(h > 0, h, 0.2 * h)
        return h @ w2 + b2

    return disc(fake_nchw).mean() - disc(real_nchw).mean()


if __name__ == "__main__":
    key = jax.random.PRNGKey(0)
    k_fake, k_real, k_w1, k_b1, k_w2, k_b2 = jax.random.split(key, 6)

    # Small shapes: batch=2, channels=4, spatial=16x16 -> D = 1024, hidden=128
    B, C, Himg, Wimg = 2, 4, 16, 16
    D = C * Himg * Wimg
    HID = 128  # lane-dense hidden width (multiple of 128)

    fake = jax.random.normal(k_fake, (B, C, Himg, Wimg), dtype=jnp.float32)
    real = jax.random.normal(k_real, (B, C, Himg, Wimg), dtype=jnp.float32)

    # Deterministic synthetic discriminator parameters.
    w1 = jax.random.normal(k_w1, (D, HID), dtype=jnp.float32) * 0.02
    b1 = jax.random.normal(k_b1, (1, HID), dtype=jnp.float32) * 0.01
    w2 = jax.random.normal(k_w2, (HID, 1), dtype=jnp.float32) * 0.1
    b2 = jax.random.normal(k_b2, (1, 1), dtype=jnp.float32) * 0.01
    params = (w1, b1, w2, b2)

    loss = jax.block_until_ready(wasserstein_loss_gan(fake, real, params))
    ref = jax.block_until_ready(_reference_loss(fake, real, params))

    # bf16 sample/weight streaming vs f32 reference -> relaxed tolerance.
    assert jnp.allclose(loss, ref, atol=3e-2, rtol=3e-2), (loss, ref)

    print("KERNEL_OK")
</pallas_src>

<mosaic_0001>
module attributes {stable_mosaic.version = 11 : i64} {
  func.func @_wgan_loss_kernel(%arg0: i32, %arg1: i32, %arg2: memref<16x1xf32, #tpu.memory_space<vmem>>, %arg3: memref<16x512xbf16, #tpu.memory_space<vmem>>, %arg4: memref<512x128xbf16, #tpu.memory_space<vmem>>, %arg5: memref<1x128xf32, #tpu.memory_space<vmem>>, %arg6: memref<1x128xf32, #tpu.memory_space<vmem>>, %arg7: memref<1x1xf32, #tpu.memory_space<vmem>>, %arg8: memref<16x128xf32, #tpu.memory_space<vmem>>) attributes {dimension_semantics = [#tpu.dimension_semantics<arbitrary>, #tpu.dimension_semantics<arbitrary>], iteration_bounds = array<i64: 1, 2>, scalar_prefetch = 0 : i64, scratch_operands = 1 : i64, tpu.core_type = #tpu.core_type<tc>, window_params = [{transform_indices = @transform_0, window_bounds = array<i64: 16, 1>}, {transform_indices = @transform_1, window_bounds = array<i64: 16, 512>}, {transform_indices = @transform_2, window_bounds = array<i64: 512, 128>}, {pipeline_mode = #tpu.pipeline_mode<synchronous>, transform_indices = @transform_3, window_bounds = array<i64: 1, 128>}, {pipeline_mode = #tpu.pipeline_mode<synchronous>, transform_indices = @transform_4, window_bounds = array<i64: 1, 128>}, {pipeline_mode = #tpu.pipeline_mode<synchronous>, transform_indices = @transform_5, window_bounds = array<i64: 1, 1>}]} {
    %c0_i32 = arith.constant 0 : i32
    %0 = arith.cmpi eq, %arg0, %c0_i32 : i32
    %c0_i32_0 = arith.constant 0 : i32
    %1 = arith.cmpi eq, %arg1, %c0_i32_0 : i32
    %2 = arith.andi %0, %1 : i1
    %3 = arith.extui %2 : i1 to i32
    %c0_i32_1 = arith.constant 0 : i32
    %4 = arith.cmpi ne, %3, %c0_i32_1 : i32
    scf.if %4 {
      %cst_12 = arith.constant 0.000000e+00 : f32
      %17 = vector.broadcast %cst_12 : f32 to vector<1x1xf32>
      %c0_13 = arith.constant 0 : index
      %c0_14 = arith.constant 0 : index
      %18 = vector.load %arg7[%c0_13, %c0_14] : memref<1x1xf32, #tpu.memory_space<vmem>>, vector<1x1xf32>
      tpu.vector_store %arg7[%c0_13, %c0_14], %17 {strides = array<i32>} : memref<1x1xf32, #tpu.memory_space<vmem>>, vector<1x1xf32>,
    } else {
    }
    %c0_i32_2 = arith.constant 0 : i32
    %5 = arith.cmpi eq, %arg1, %c0_i32_2 : i32
    %6 = arith.extui %5 : i1 to i32
    %c0_i32_3 = arith.constant 0 : i32
    %7 = arith.cmpi ne, %6, %c0_i32_3 : i32
    scf.if %7 {
      %cst_12 = arith.constant 0.000000e+00 : f32
      %17 = vector.broadcast %cst_12 : f32 to vector<16x128xf32>
      %c0_13 = arith.constant 0 : index
      %c0_14 = arith.constant 0 : index
      %18 = vector.load %arg8[%c0_13, %c0_14] : memref<16x128xf32, #tpu.memory_space<vmem>>, vector<16x128xf32>
      tpu.vector_store %arg8[%c0_13, %c0_14], %17 {strides = array<i32>} : memref<16x128xf32, #tpu.memory_space<vmem>>, vector<16x128xf32>,
    } else {
    }
    %c0 = arith.constant 0 : index
    %c0_4 = arith.constant 0 : index
    %8 = vector.load %arg8[%c0, %c0_4] : memref<16x128xf32, #tpu.memory_space<vmem>>, vector<16x128xf32>
    %c0_5 = arith.constant 0 : index
    %c0_6 = arith.constant 0 : index
    %9 = vector.load %arg3[%c0_5, %c0_6] : memref<16x512xbf16, #tpu.memory_space<vmem>>, vector<16x512xbf16>
    %c0_7 = arith.constant 0 : index
    %c0_8 = arith.constant 0 : index
    %10 = vector.load %arg4[%c0_7, %c0_8] : memref<512x128xbf16, #tpu.memory_space<vmem>>, vector<512x128xbf16>
    %cst = arith.constant dense<0.000000e+00> : vector<16x128xf32>
    %11 = tpu.matmul %9, %10, %cst {dimension_numbers = #tpu.dot_dimension_numbers<[1], [0], [0], [1], [0, 0, 1, 1], [], []>} : vector<16x512xbf16>, vector<512x128xbf16>, vector<16x128xf32> -> vector<16x128xf32>
    %12 = arith.addf %8, %11 : vector<16x128xf32>
    %c0_9 = arith.constant 0 : index
    %c0_10 = arith.constant 0 : index
    %13 = vector.load %arg8[%c0_9, %c0_10] : memref<16x128xf32, #tpu.memory_space<vmem>>, vector<16x128xf32>
    tpu.vector_store %arg8[%c0_9, %c0_10], %12 {strides = array<i32>} : memref<16x128xf32, #tpu.memory_space<vmem>>, vector<16x128xf32>,
    %c1_i32 = arith.constant 1 : i32
    %14 = arith.cmpi eq, %arg1, %c1_i32 : i32
    %15 = arith.extui %14 : i1 to i32
    %c0_i32_11 = arith.constant 0 : i32
    %16 = arith.cmpi ne, %15, %c0_i32_11 : i32
    scf.if %16 {
      %c0_12 = arith.constant 0 : index
      %c0_13 = arith.constant 0 : index
      %17 = vector.load %arg8[%c0_12, %c0_13] : memref<16x128xf32, #tpu.memory_space<vmem>>, vector<16x128xf32>
      %c0_14 = arith.constant 0 : index
      %c0_15 = arith.constant 0 : index
      %18 = vector.load %arg5[%c0_14, %c0_15] : memref<1x128xf32, #tpu.memory_space<vmem>>, vector<1x128xf32>
      %19 = vector.broadcast %18 : vector<1x128xf32> to vector<16x128xf32>
      %20 = arith.addf %17, %19 : vector<16x128xf32>
      %cst_16 = arith.constant 0.000000e+00 : f32
      %21 = vector.broadcast %cst_16 : f32 to vector<16x128xf32>
      %22 = arith.cmpf ogt, %20, %21 : vector<16x128xf32>
      %cst_17 = arith.constant 2.000000e-01 : f32
      %23 = vector.broadcast %cst_17 : f32 to vector<16x128xf32>
      %24 = arith.mulf %23, %20 : vector<16x128xf32>
      %25 = arith.select %22, %20, %24 : vector<16x128xi1>, vector<16x128xf32>
      %c0_18 = arith.constant 0 : index
      %c0_19 = arith.constant 0 : index
      %26 = vector.load %arg2[%c0_18, %c0_19] : memref<16x1xf32, #tpu.memory_space<vmem>>, vector<16x1xf32>
      %27 = vector.broadcast %26 : vector<16x1xf32> to vector<16x128xf32>
      %28 = arith.mulf %27, %25 : vector<16x128xf32>
      %cst_20 = arith.constant dense<0.000000e+00> : vector<128xf32>
      %29 = vector.multi_reduction <add>, %28, %cst_20 [0] : vector<16x128xf32> to vector<128xf32>
      %30 = vector.shape_cast %29 : vector<128xf32> to vector<1x128xf32>
      %c0_21 = arith.constant 0 : index
      %c0_22 = arith.constant 0 : index
      %31 = vector.load %arg6[%c0_21, %c0_22] : memref<1x128xf32, #tpu.memory_space<vmem>>, vector<1x128xf32>
      %32 = arith.mulf %30, %31 : vector<1x128xf32>
      %33 = vector.shape_cast %32 : vector<1x128xf32> to vector<1x1x128xf32>
      %cst_23 = arith.constant dense<0.000000e+00> : vector<1xf32>
      %34 = vector.multi_reduction <add>, %33, %cst_23 [1, 2] : vector<1x1x128xf32> to vector<1xf32>
      %35 = vector.shape_cast %34 : vector<1xf32> to vector<1x1x1xf32>
      %36 = vector.extract %35[0, 0, 0] : f32 from vector<1x1x1xf32>
      %c0_24 = arith.constant 0 : index
      %c0_25 = arith.constant 0 : index
      %37 = vector.load %arg7[%c0_24, %c0_25] : memref<1x1xf32, #tpu.memory_space<vmem>>, vector<1x1xf32>
      %38 = vector.broadcast %36 : f32 to vector<1x1xf32>
      %39 = arith.addf %37, %38 : vector<1x1xf32>
      %c0_26 = arith.constant 0 : index
      %c0_27 = arith.constant 0 : index
      %40 = vector.load %arg7[%c0_26, %c0_27] : memref<1x1xf32, #tpu.memory_space<vmem>>, vector<1x1xf32>
      tpu.vector_store %arg7[%c0_26, %c0_27], %39 {strides = array<i32>} : memref<1x1xf32, #tpu.memory_space<vmem>>, vector<1x1xf32>,
    } else {
    }
    return
  }
  func.func @transform_0(%arg0: i32, %arg1: i32) -> (i32, i32) {
    %c0_i32 = arith.constant 0 : i32
    %c0_i32_0 = arith.constant 0 : i32
    return %arg0, %c0_i32 : i32, i32
  }
  func.func @transform_1(%arg0: i32, %arg1: i32) -> (i32, i32) {
    %c0_i32 = arith.constant 0 : i32
    return %arg0, %arg1 : i32, i32
  }
  func.func @transform_2(%arg0: i32, %arg1: i32) -> (i32, i32) {
    %c0_i32 = arith.constant 0 : i32
    %c0_i32_0 = arith.constant 0 : i32
    return %arg1, %c0_i32 : i32, i32
  }
  func.func @transform_3(%arg0: i32, %arg1: i32) -> (i32, i32) {
    %c0_i32 = arith.constant 0 : i32
    %c0_i32_0 = arith.constant 0 : i32
    %c0_i32_1 = arith.constant 0 : i32
    return %c0_i32, %c0_i32_0 : i32, i32
  }
  func.func @transform_4(%arg0: i32, %arg1: i32) -> (i32, i32) {
    %c0_i32 = arith.constant 0 : i32
    %c0_i32_0 = arith.constant 0 : i32
    %c0_i32_1 = arith.constant 0 : i32
    return %c0_i32, %c0_i32_0 : i32, i32
  }
  func.func @transform_5(%arg0: i32, %arg1: i32) -> (i32, i32) {
    %c0_i32 = arith.constant 0 : i32
    %c0_i32_0 = arith.constant 0 : i32
    %c0_i32_1 = arith.constant 0 : i32
    return %c0_i32, %c0_i32_0 : i32, i32
  }
}

</mosaic_0001>

<llo_original>
// kernel: tpu_custom_call.1
$region0: #{tpu_custom_call.1}
  #allocation0 [shape = 'u32[]', space=smem, size = 0x4, offset = 0x4, fixed_abs, tag = 'smem constant byte address 0x4 - core index']
  #allocation1 [shape = 'u32[144,128]{1,0:T(1,128)}', space=vmem, size = 0x12000, scoped, tag = 'internal scratch']
  #allocation2 [shape = 'f32[16,128]{1,0:T(8,128)}', space=vmem, size = 0x2000, scoped, tag = 'scratch operand']
  %s0 = inlined_call_operand.vmem [shape: f32[16,1], index: 0, kind: input, shape index: {}]
  %s1 = inlined_call_operand.hbm [shape: bf16[16,1024], index: 1, kind: input, shape index: {}]
  %s2 = inlined_call_operand.hbm [shape: bf16[1024,128], index: 2, kind: input, shape index: {}]
  %s3 = inlined_call_operand.vmem [shape: f32[1,128], index: 3, kind: input, shape index: {}]
  %s4 = inlined_call_operand.vmem [shape: f32[1,128], index: 4, kind: input, shape index: {}]
  %s5 = inlined_call_operand.hbm [shape: f32[1,1], index: 5, kind: output, shape index: {}]
  %s6 = sld [smem:[#allocation0]]
  $region73: #{tpu_custom_call.1} parent=0
    _
  %s8 = ssub.s32 1, %s6
  %s9 = scalar_select 0, %s8, %s6
  $region1: #{tpu_custom_call.1} parent=0
    #allocation3 [shape = 'u8[32768]{0}', space=vmem, size = 0x8000, scoped, tag = 'input window, operand 1']
    #allocation4 [shape = 's32[2]{0}', space=sflag, size = 0x8, scoped, tag = 'scoped memory for tpu_custom_call.1']
    #allocation5 [shape = 's32[2]{0}', space=sflag, size = 0x8, scoped, tag = 'scoped memory for tpu_custom_call.1']
    #allocation6 [shape = 'u8[262144]{0}', space=vmem, size = 0x40000, scoped, tag = 'input window, operand 2']
    #allocation7 [shape = 's32[2]{0}', space=sflag, size = 0x8, scoped, tag = 'scoped memory for tpu_custom_call.1']
    #allocation8 [shape = 'u8[512]{0}', space=vmem, size = 0x400, scoped, tag = 'output window, operand 0, single buffered']
    %10 = vsyncpa [#allocation4], 0
    %s11 = scalar_lea.sflag [#allocation4], 1
    %12 = vsyncpa %s11, 0
    %13 = vsyncpa [#allocation7], 0
    %s14 = scalar_lea.sflag [#allocation7], 1
    %15 = vsyncpa %s14, 0
    %16 = vsyncpa [#allocation5], 0
    loop: start=0, step=1, limit=4
    $region2: #{tpu_custom_call.1} parent=1 // loop_pre_header
      _
    $region3: #{tpu_custom_call.1} parent=1 // loop_header
      %s18 = sphi 0, %s22
      %p19 = scmp.ge.s32.totalorder %s18, 4
      %s25 = sphi 0, %s37
      %s26 = sphi 0, %s33
      %s27 = sphi 0, %s25
      %s28 = sphi 0, %s26
      %s29 = sphi 0, %s27
      %s30 = sphi 0, %s28
      %s40 = sphi 0, %s42
      %s43 = sphi 0, %s40
      %s44 = sphi 0, %s43
      %s60 = sphi 0, %s44
      %s68 = sphi 0, %s70
      %s71 = sphi 0, %s68
      %s72 = sphi 0, %s71
      %s88 = sphi 0, %s72
      %s94 = sphi 0, %s96
      %s97 = sphi 0, %s94
      %s98 = sphi 0, %s97
      %s114 = sphi 0, %s98
      %s118 = sphi 0, %s118
      %s120 = sphi 0, %s118
      %s121 = sphi 0, %s120
      %s135 = sphi 0, %s121
      %s139 = sphi 0, %s139
      %s141 = sphi 0, %s139
      %s142 = sphi 0, %s141
      %s156 = sphi 0, %s142
      %s160 = sphi 0, %s160
      %s162 = sphi 0, %s160
      %s163 = sphi 0, %s162
      %s177 = sphi 0, %s163
    $region4: #{tpu_custom_call.1} parent=1 // loop_header_branch
      %21 = sbr.rel (%p19) target = $region8
    $region5: #{tpu_custom_call.1} parent=1 // loop_body
      %s23 = ssub.s32 %s18, 1
      %s24 = ssub.s32 %s18, 2
      %s31 = sadd.s32 1, %s26
      %p32 = scmp.ge.s32.totalorder %s31, 2
      %s33 = scalar_select %p32, 0, %s31
      %s34 = sadd.s32 1, %s25
      %s35 = scalar_select %p32, %s34, %s25
      %p36 = scmp.ge.s32.totalorder %s35, 1
      %s37 = scalar_select %p36, 0, %s35
      %s38 = ssub.s32 %s25, %s37
      %p39 = scmp.eq.s32.totalorder %s38, 0
      %s41 = sadd.s32 %s40, 1
      %s42 = scalar_select %p39, %s40, %s41
      %p45 = pneg %p39
      %p46 = scmp.eq.s32.totalorder %s18, 1
      %p47 = por %p45, %p46
      %p48 = scmp.ne.s32.totalorder %s40, %s43
      %p49 = scmp.eq.s32.totalorder %s18, 0
      %p50 = por %p48, %p49
      %p51 = scmp.ne.s32.totalorder %s40, %s43
      %p52 = scmp.eq.s32.totalorder %s23, 1
      %p53 = por %p51, %p52
      %p54 = scmp.ne.s32.totalorder %s43, %s44
      %p55 = scmp.eq.s32.totalorder %s23, 0
      %p56 = por %p54, %p55
      %p57 = scmp.ne.s32.totalorder %s43, %s44
      %p58 = scmp.eq.s32.totalorder %s24, 1
      %p59 = por %p57, %p58
      %p61 = scmp.ne.s32.totalorder %s44, %s60
      %p62 = scmp.eq.s32.totalorder %s24, 0
      %p63 = por %p61, %p62
      %s64 = ssub.s32 %s25, %s37
      %s65 = ssub.s32 %s26, %s33
      %s66 = sor.u32 %s64, %s65
      %p67 = scmp.eq.s32.totalorder %s66, 0
      %s69 = sadd.s32 %s68, 1
      %s70 = scalar_select %p67, %s68, %s69
      %p73 = pneg %p67
      %p74 = scmp.eq.s32.totalorder %s18, 1
      %p75 = por %p73, %p74
      %p76 = scmp.ne.s32.totalorder %s68, %s71
      %p77 = scmp.eq.s32.totalorder %s18, 0
      %p78 = por %p76, %p77
      %p79 = scmp.ne.s32.totalorder %s68, %s71
      %p80 = scmp.eq.s32.totalorder %s23, 1
      %p81 = por %p79, %p80
      %p82 = scmp.ne.s32.totalorder %s71, %s72
      %p83 = scmp.eq.s32.totalorder %s23, 0
      %p84 = por %p82, %p83
      %p85 = scmp.ne.s32.totalorder %s71, %s72
      %p86 = scmp.eq.s32.totalorder %s24, 1
      %p87 = por %p85, %p86
      %p89 = scmp.ne.s32.totalorder %s72, %s88
      %p90 = scmp.eq.s32.totalorder %s24, 0
      %p91 = por %p89, %p90
      %s92 = ssub.s32 %s26, %s33
      %p93 = scmp.eq.s32.totalorder %s92, 0
      %s95 = sadd.s32 %s94, 1
      %s96 = scalar_select %p93, %s94, %s95
      %p99 = pneg %p93
      %p100 = scmp.eq.s32.totalorder %s18, 1
      %p101 = por %p99, %p100
      %p102 = scmp.ne.s32.totalorder %s94, %s97
      %p103 = scmp.eq.s32.totalorder %s18, 0
      %p104 = por %p102, %p103
      %p105 = scmp.ne.s32.totalorder %s94, %s97
      %p106 = scmp.eq.s32.totalorder %s23, 1
      %p107 = por %p105, %p106
      %p108 = scmp.ne.s32.totalorder %s97, %s98
      %p109 = scmp.eq.s32.totalorder %s23, 0
      %p110 = por %p108, %p109
      %p111 = scmp.ne.s32.totalorder %s97, %s98
      %p112 = scmp.eq.s32.totalorder %s24, 1
      %p113 = por %p111, %p112
      %p115 = scmp.ne.s32.totalorder %s98, %s114
      %p116 = scmp.eq.s32.totalorder %s24, 0
      %p117 = por %p115, %p116
      %s119 = sadd.s32 %s118, 1
      %p122 = scmp.eq.s32.totalorder %s18, 1
      %p123 = scmp.ne.s32.totalorder %s118, %s120
      %p124 = scmp.eq.s32.totalorder %s18, 0
      %p125 = por %p123, %p124
      %p126 = scmp.ne.s32.totalorder %s118, %s120
      %p127 = scmp.eq.s32.totalorder %s23, 1
      %p128 = por %p126, %p127
      %p129 = scmp.ne.s32.totalorder %s120, %s121
      %p130 = scmp.eq.s32.totalorder %s23, 0
      %p131 = por %p129, %p130
      %p132 = scmp.ne.s32.totalorder %s120, %s121
      %p133 = scmp.eq.s32.totalorder %s24, 1
      %p134 = por %p132, %p133
      %p136 = scmp.ne.s32.totalorder %s121, %s135
      %p137 = scmp.eq.s32.totalorder %s24, 0
      %p138 = por %p136, %p137
      %s140 = sadd.s32 %s139, 1
      %p143 = scmp.eq.s32.totalorder %s18, 1
      %p144 = scmp.ne.s32.totalorder %s139, %s141
      %p145 = scmp.eq.s32.totalorder %s18, 0
      %p146 = por %p144, %p145
      %p147 = scmp.ne.s32.totalorder %s139, %s141
      %p148 = scmp.eq.s32.totalorder %s23, 1
      %p149 = por %p147, %p148
      %p150 = scmp.ne.s32.totalorder %s141, %s142
      %p151 = scmp.eq.s32.totalorder %s23, 0
      %p152 = por %p150, %p151
      %p153 = scmp.ne.s32.totalorder %s141, %s142
      %p154 = scmp.eq.s32.totalorder %s24, 1
      %p155 = por %p153, %p154
      %p157 = scmp.ne.s32.totalorder %s142, %s156
      %p158 = scmp.eq.s32.totalorder %s24, 0
      %p159 = por %p157, %p158
      %s161 = sadd.s32 %s160, 1
      %p164 = scmp.eq.s32.totalorder %s18, 1
      %p165 = scmp.ne.s32.totalorder %s160, %s162
      %p166 = scmp.eq.s32.totalorder %s18, 0
      %p167 = por %p165, %p166
      %p168 = scmp.ne.s32.totalorder %s160, %s162
      %p169 = scmp.eq.s32.totalorder %s23, 1
      %p170 = por %p168, %p169
      %p171 = scmp.ne.s32.totalorder %s162, %s163
      %p172 = scmp.eq.s32.totalorder %s23, 0
      %p173 = por %p171, %p172
      %p174 = scmp.ne.s32.totalorder %s162, %s163
      %p175 = scmp.eq.s32.totalorder %s24, 1
      %p176 = por %p174, %p175
      %p178 = scmp.ne.s32.totalorder %s163, %s177
      %p179 = scmp.eq.s32.totalorder %s24, 0
      %p180 = por %p178, %p179
      %p181 = scmp.le.s32.totalorder 1, %s18
      %p182 = scmp.lt.s32.totalorder %s18, 3
      %p183 = pnand %p181, %p182
      %p184 = pneg %p183
      // Predicated region
      $region9: #{tpu_custom_call.1} parent=5 // pred_check
        _
      $region10: #{tpu_custom_call.1} parent=5 // pred_check_branch
        %186 = sbr.rel (%p183) target = $region12
      $region11: #{tpu_custom_call.1} parent=5 // pred_region
        %s187 = ssub.s32 %s18, 1
        // Predicated region
        $region13: #{tpu_custom_call.1} parent=11 // pred_check
          %p188 = pneg %p56
        $region14: #{tpu_custom_call.1} parent=11 // pred_check_branch
          %190 = sbr.rel (%p188) target = $region16
        $region15: #{tpu_custom_call.1} parent=11 // pred_region
          %s191 = smul.u32 2, %s27
          %p192 = scmp.lt.s32.totalorder %s191, 1
          %s193 = scalar_select %p192, %s191, 1
          %s194 = smul.addr %s193, 8
          %s195 = scalar_lea.vmem %s0, %s194
          %s196 = smul.u32 2, %s27
        $region16: #{tpu_custom_call.1} parent=11 // pred_fallthru
          _
        // Predicated region
        $region17: #{tpu_custom_call.1} parent=11 // pred_check
          %p197 = pneg %p131
        $region18: #{tpu_custom_call.1} parent=11 // pred_check_branch
          %199 = sbr.rel (%p197) target = $region20
        $region19: #{tpu_custom_call.1} parent=11 // pred_region
          _
        $region20: #{tpu_custom_call.1} parent=11 // pred_fallthru
          _
        // Predicated region
        $region21: #{tpu_custom_call.1} parent=11 // pred_check
          %p200 = pneg %p152
        $region22: #{tpu_custom_call.1} parent=11 // pred_check_branch
          %202 = sbr.rel (%p200) target = $region24
        $region23: #{tpu_custom_call.1} parent=11 // pred_region
          _
        $region24: #{tpu_custom_call.1} parent=11 // pred_fallthru
          _
      $region12: #{tpu_custom_call.1} parent=5 // pred_fallthru
        _
      %p203 = scmp.lt.s32.totalorder %s18, 2
      // Predicated region
      $region25: #{tpu_custom_call.1} parent=5 // pred_check
        %p204 = pneg %p203
      $region26: #{tpu_custom_call.1} parent=5 // pred_check_branch
        %206 = sbr.rel (%p204) target = $region28
      $region27: #{tpu_custom_call.1} parent=5 // pred_region
        // Predicated region
        $region29: #{tpu_custom_call.1} parent=27 // pred_check
          %p207 = pneg %p78
        $region30: #{tpu_custom_call.1} parent=27 // pred_check_branch
          %209 = sbr.rel (%p207) target = $region32
        $region31: #{tpu_custom_call.1} parent=27 // pred_region
          %s210 = sand.u32 %s68, 1
          %s211 = scalar_lea.sflag [#allocation4], %s210
          %s212 = sand.u32 %s68, 1
          %s213 = smul.addr %s212, 32
          %s214 = scalar_lea.vmem [#allocation3], %s213
          %s215 = smul.u32 2, %s25
          %s216 = smul.u32 4, %s26
          %s218 = ssub.s32 512, 512
          %219 = vsyncadd %s211, %s218
          %s220 = smul.addr %s215, 8
          %s221 = sadd.s32 %s216, %s220
          %s222 = smul.addr %s221, 64
          %s223 = scalar_lea.hbm %s1, %s222
          %s224 = sshll.u32 %s214, 4
          %s225 = int_to_ptr.vmem [resolvable:$true] %s224
          %230 = dma.hbm_to_vmem [thread:$0]  %s223, 512, %s225, %s211, 512, 256, 16
        $region32: #{tpu_custom_call.1} parent=27 // pred_fallthru
          _
        // Predicated region
        $region33: #{tpu_custom_call.1} parent=27 // pred_check
          %p231 = pneg %p104
        $region34: #{tpu_custom_call.1} parent=27 // pred_check_branch
          %233 = sbr.rel (%p231) target = $region36
        $region35: #{tpu_custom_call.1} parent=27 // pred_region
          %s234 = sand.u32 %s94, 1
          %s235 = scalar_lea.sflag [#allocation7], %s234
          %s236 = sand.u32 %s94, 1
          %s237 = smul.addr %s236, 256
          %s238 = scalar_lea.vmem [#allocation6], %s237
          %s239 = smul.u32 64, %s26
          %s241 = ssub.s32 4096, 4096
          %242 = vsyncadd %s235, %s241
          %s243 = smul.addr %s239, 64
          %s244 = scalar_lea.hbm %s2, %s243
          %s245 = sshll.u32 %s238, 4
          %s246 = int_to_ptr.vmem [resolvable:$true] %s245
          %251 = dma.hbm_to_vmem [thread:$0]  %s244, 4096, %s246, %s235, 64, 64, 4
        $region36: #{tpu_custom_call.1} parent=27 // pred_fallthru
          _
      $region28: #{tpu_custom_call.1} parent=5 // pred_fallthru
        _
      %p252 = scmp.le.s32.totalorder 1, %s18
      %p253 = scmp.lt.s32.totalorder %s18, 3
      %p254 = pnand %p252, %p253
      %p255 = pneg %p254
      // Predicated region
      $region37: #{tpu_custom_call.1} parent=5 // pred_check
        _
      $region38: #{tpu_custom_call.1} parent=5 // pred_check_branch
        %257 = sbr.rel (%p254) target = $region40
      $region39: #{tpu_custom_call.1} parent=5 // pred_region
        %s258 = ssub.s32 %s18, 1
        %s259 = sand.u32 %s71, 1
        %s260 = scalar_lea.sflag [#allocation4], %s259
        %s261 = sand.u32 %s71, 1
        %s262 = smul.addr %s261, 32
        %s263 = scalar_lea.vmem [#allocation3], %s262
        // Predicated region
        $region41: #{tpu_custom_call.1} parent=39 // pred_check
          %p264 = pneg %p84
        $region42: #{tpu_custom_call.1} parent=39 // pred_check_branch
          %266 = sbr.rel (%p264) target = $region44
        $region43: #{tpu_custom_call.1} parent=39 // pred_region
          %267 = dma.done %s260, 512
        $region44: #{tpu_custom_call.1} parent=39 // pred_fallthru
          _
        %s268 = sand.u32 %s97, 1
        %s269 = scalar_lea.sflag [#allocation7], %s268
        %s270 = sand.u32 %s97, 1
        %s271 = smul.addr %s270, 256
        %s272 = scalar_lea.vmem [#allocation6], %s271
        // Predicated region
        $region45: #{tpu_custom_call.1} parent=39 // pred_check
          %p273 = pneg %p110
        $region46: #{tpu_custom_call.1} parent=39 // pred_check_branch
          %275 = sbr.rel (%p273) target = $region48
        $region47: #{tpu_custom_call.1} parent=39 // pred_region
          %276 = dma.done %s269, 4096
        $region48: #{tpu_custom_call.1} parent=39 // pred_fallthru
          _
        %s277 = smul.u32 2, %s27
        %p278 = scmp.lt.s32.totalorder %s277, 1
        %s279 = scalar_select %p278, %s277, 1
        %s280 = smul.addr %s279, 8
        %s281 = scalar_lea.vmem %s0, %s280
        %p282 = pneg %p56
        %p283 = pneg %p53
        %s284 = sand.u32 %s71, 1
        %s285 = scalar_lea.sflag [#allocation4], %s284
        %s286 = sand.u32 %s71, 1
        %s287 = smul.addr %s286, 32
        %s288 = scalar_lea.vmem [#allocation3], %s287
        %p289 = pneg %p84
        %p290 = pneg %p81
        %s291 = sand.u32 %s97, 1
        %s292 = scalar_lea.sflag [#allocation7], %s291
        %s293 = sand.u32 %s97, 1
        %s294 = smul.addr %s293, 256
        %s295 = scalar_lea.vmem [#allocation6], %s294
        %p296 = pneg %p110
        %p297 = pneg %p107
        %p298 = pneg %p131
        %p299 = pneg %p128
        %p300 = pneg %p152
        %p301 = pneg %p149
        %p302 = pneg %p173
        %p303 = pneg %p170
        %s304 = smul.u32 2, %s27
        %p305 = scmp.lt.s32.totalorder %s304, 1
        %s306 = scalar_select %p305, %s304, 1
        %s307 = smul.addr %s306, 8
        %s308 = scalar_lea.vmem %s0, %s307
        %s309 = smul.u32 2, %s27
        %s310 = smul.u32 2, %s27
        %s311 = smul.u32 4, %s28
        %s312 = smul.u32 64, %s28
        %p314 = scmp.eq.s32.totalorder %s27, 0
        %p315 = scmp.eq.s32.totalorder %s28, 0
        %p316 = pnand %p314, %p315
        %p317 = pneg %p316
        // Predicated region
        $region49: #{tpu_custom_call.1} parent=39 // pred_check
          _
        $region50: #{tpu_custom_call.1} parent=39 // pred_check_branch
          %319 = sbr.rel (%p316) target = $region52
        $region51: #{tpu_custom_call.1} parent=39 // pred_region
          %vm320 = vcmask 0
          %321 = vst.msk [vmem:[#allocation8] sm:$0x1] %vm320, 0.0
        $region52: #{tpu_custom_call.1} parent=39 // pred_fallthru
          _
        // Predicated region
        $region53: #{tpu_custom_call.1} parent=39 // pred_check
          %p322 = pneg %p315
        $region54: #{tpu_custom_call.1} parent=39 // pred_check_branch
          %324 = sbr.rel (%p322) target = $region56
        $region55: #{tpu_custom_call.1} parent=39 // pred_region
          %325 = vst [vmem:[#allocation2] sm:$0xff] 0.0
          %326 = vst [vmem:[#allocation2 + $0x8] sm:$0xff] 0.0
        $region56: #{tpu_custom_call.1} parent=39 // pred_fallthru
          _
        %v327 = vld [vmem:[#allocation2] sm:$0xff]
        %v328 = vld [vmem:[#allocation2 + $0x8] sm:$0xff]
        %v329 = vld [vmem:[%s263] sm:$0xff]
        %v330 = vld [vmem:[%s263 + $0x8] sm:$0xff]
        %v331 = vld [vmem:[%s263 + $0x10] sm:$0xff]
        %v332 = vld [vmem:[%s263 + $0x18] sm:$0xff]
        %v333 = vld [vmem:[%s272] sm:$0xf]
        %v334 = vld [vmem:[%s272 + $0x4] sm:$0xf]
        %v335 = vld [vmem:[%s272 + $0x8] sm:$0xf]
        %v336 = vld [vmem:[%s272 + $0xc] sm:$0xf]
        %v337 = vld [vmem:[%s272 + $0x10] sm:$0xf]
        %v338 = vld [vmem:[%s272 + $0x14] sm:$0xf]
        %v339 = vld [vmem:[%s272 + $0x18] sm:$0xf]
        %v340 = vld [vmem:[%s272 + $0x1c] sm:$0xf]
        %v341 = vld [vmem:[%s272 + $0x20] sm:$0xf]
        %v342 = vld [vmem:[%s272 + $0x24] sm:$0xf]
        %v343 = vld [vmem:[%s272 + $0x28] sm:$0xf]
        %v344 = vld [vmem:[%s272 + $0x2c] sm:$0xf]
        %v345 = vld [vmem:[%s272 + $0x30] sm:$0xf]
        %v346 = vld [vmem:[%s272 + $0x34] sm:$0xf]
        %v347 = vld [vmem:[%s272 + $0x38] sm:$0xf]
        %v348 = vld [vmem:[%s272 + $0x3c] sm:$0xf]
        %v349 = vld [vmem:[%s272 + $0x40] sm:$0xf]
        %v350 = vld [vmem:[%s272 + $0x44] sm:$0xf]
        %v351 = vld [vmem:[%s272 + $0x48] sm:$0xf]
        %v352 = vld [vmem:[%s272 + $0x4c] sm:$0xf]
        %v353 = vld [vmem:[%s272 + $0x50] sm:$0xf]
        %v354 = vld [vmem:[%s272 + $0x54] sm:$0xf]
        %v355 = vld [vmem:[%s272 + $0x58] sm:$0xf]
        %v356 = vld [vmem:[%s272 + $0x5c] sm:$0xf]
        %v357 = vld [vmem:[%s272 + $0x60] sm:$0xf]
        %v358 = vld [vmem:[%s272 + $0x64] sm:$0xf]
        %v359 = vld [vmem:[%s272 + $0x68] sm:$0xf]
        %v360 = vld [vmem:[%s272 + $0x6c] sm:$0xf]
        %v361 = vld [vmem:[%s272 + $0x70] sm:$0xf]
        %v362 = vld [vmem:[%s272 + $0x74] sm:$0xf]
        %v363 = vld [vmem:[%s272 + $0x78] sm:$0xf]
        %v364 = vld [vmem:[%s272 + $0x7c] sm:$0xf]
        %v365 = vld [vmem:[%s272 + $0x80] sm:$0xf]
        %v366 = vld [vmem:[%s272 + $0x84] sm:$0xf]
        %v367 = vld [vmem:[%s272 + $0x88] sm:$0xf]
        %v368 = vld [vmem:[%s272 + $0x8c] sm:$0xf]
        %v369 = vld [vmem:[%s272 + $0x90] sm:$0xf]
        %v370 = vld [vmem:[%s272 + $0x94] sm:$0xf]
        %v371 = vld [vmem:[%s272 + $0x98] sm:$0xf]
        %v372 = vld [vmem:[%s272 + $0x9c] sm:$0xf]
        %v373 = vld [vmem:[%s272 + $0xa0] sm:$0xf]
        %v374 = vld [vmem:[%s272 + $0xa4] sm:$0xf]
        %v375 = vld [vmem:[%s272 + $0xa8] sm:$0xf]
        %v376 = vld [vmem:[%s272 + $0xac] sm:$0xf]
        %v377 = vld [vmem:[%s272 + $0xb0] sm:$0xf]
        %v378 = vld [vmem:[%s272 + $0xb4] sm:$0xf]
        %v379 = vld [vmem:[%s272 + $0xb8] sm:$0xf]
        %v380 = vld [vmem:[%s272 + $0xbc] sm:$0xf]
        %v381 = vld [vmem:[%s272 + $0xc0] sm:$0xf]
        %v382 = vld [vmem:[%s272 + $0xc4] sm:$0xf]
        %v383 = vld [vmem:[%s272 + $0xc8] sm:$0xf]
        %v384 = vld [vmem:[%s272 + $0xcc] sm:$0xf]
        %v385 = vld [vmem:[%s272 + $0xd0] sm:$0xf]
        %v386 = vld [vmem:[%s272 + $0xd4] sm:$0xf]
        %v387 = vld [vmem:[%s272 + $0xd8] sm:$0xf]
        %v388 = vld [vmem:[%s272 + $0xdc] sm:$0xf]
        %v389 = vld [vmem:[%s272 + $0xe0] sm:$0xf]
        %v390 = vld [vmem:[%s272 + $0xe4] sm:$0xf]
        %v391 = vld [vmem:[%s272 + $0xe8] sm:$0xf]
        %v392 = vld [vmem:[%s272 + $0xec] sm:$0xf]
        %v393 = vld [vmem:[%s272 + $0xf0] sm:$0xf]
        %v394 = vld [vmem:[%s272 + $0xf4] sm:$0xf]
        %v395 = vld [vmem:[%s272 + $0xf8] sm:$0xf]
        %v396 = vld [vmem:[%s272 + $0xfc] sm:$0xf]
        %v401 = vunpack.c.l.b16 %v329
        %v402 = vunpack.c.h.b16 %v329
        %v403 = vunpack.c.l.b16 %v330
        %v404 = vunpack.c.h.b16 %v330
        %v405 = vunpack.c.l.b16 %v331
        %v406 = vunpack.c.h.b16 %v331
        %v407 = vunpack.c.l.b16 %v332
        %v408 = vunpack.c.h.b16 %v332
        %v409 = vpack.c.b16 %v405, %v401
        %v410 = vpack.c.b16 %v406, %v402
        %v411 = vpack.c.b16 %v407, %v403
        %v412 = vpack.c.b16 %v408, %v404
        %v481 = vunpack.c.l.b16 %v333
        %v482 = vunpack.c.l.b16 %v334
        %v483 = vunpack.c.l.b16 %v335
        %v484 = vunpack.c.l.b16 %v336
        %v485 = vunpack.c.l.b16 %v337
        %v486 = vunpack.c.l.b16 %v338
        %v487 = vunpack.c.l.b16 %v339
        %v488 = vunpack.c.l.b16 %v340
        %v489 = vunpack.c.l.b16 %v341
        %v490 = vunpack.c.l.b16 %v342
        %v491 = vunpack.c.l.b16 %v343
        %v492 = vunpack.c.l.b16 %v344
        %v493 = vunpack.c.l.b16 %v345
        %v494 = vunpack.c.l.b16 %v346
        %v495 = vunpack.c.l.b16 %v347
        %v496 = vunpack.c.l.b16 %v348
        %v497 = vunpack.c.l.b16 %v349
        %v498 = vunpack.c.l.b16 %v350
        %v499 = vunpack.c.l.b16 %v351
        %v500 = vunpack.c.l.b16 %v352
        %v501 = vunpack.c.l.b16 %v353
        %v502 = vunpack.c.l.b16 %v354
        %v503 = vunpack.c.l.b16 %v355
        %v504 = vunpack.c.l.b16 %v356
        %v505 = vunpack.c.l.b16 %v357
        %v506 = vunpack.c.l.b16 %v358
        %v507 = vunpack.c.l.b16 %v359
        %v508 = vunpack.c.l.b16 %v360
        %v509 = vunpack.c.l.b16 %v361
        %v510 = vunpack.c.l.b16 %v362
        %v511 = vunpack.c.l.b16 %v363
        %v512 = vunpack.c.l.b16 %v364
        %v513 = vunpack.c.l.b16 %v365
        %v514 = vunpack.c.l.b16 %v366
        %v515 = vunpack.c.l.b16 %v367
        %v516 = vunpack.c.l.b16 %v368
        %v517 = vunpack.c.l.b16 %v369
        %v518 = vunpack.c.l.b16 %v370
        %v519 = vunpack.c.l.b16 %v371
        %v520 = vunpack.c.l.b16 %v372
        %v521 = vunpack.c.l.b16 %v373
        %v522 = vunpack.c.l.b16 %v374
        %v523 = vunpack.c.l.b16 %v375
        %v524 = vunpack.c.l.b16 %v376
        %v525 = vunpack.c.l.b16 %v377
        %v526 = vunpack.c.l.b16 %v378
        %v527 = vunpack.c.l.b16 %v379
        %v528 = vunpack.c.l.b16 %v380
        %v529 = vunpack.c.l.b16 %v381
        %v530 = vunpack.c.l.b16 %v382
        %v531 = vunpack.c.l.b16 %v383
        %v532 = vunpack.c.l.b16 %v384
        %v533 = vunpack.c.l.b16 %v385
        %v534 = vunpack.c.l.b16 %v386
        %v535 = vunpack.c.l.b16 %v387
        %v536 = vunpack.c.l.b16 %v388
        %v537 = vunpack.c.l.b16 %v389
        %v538 = vunpack.c.l.b16 %v390
        %v539 = vunpack.c.l.b16 %v391
        %v540 = vunpack.c.l.b16 %v392
        %v541 = vunpack.c.l.b16 %v393
        %v542 = vunpack.c.l.b16 %v394
        %v543 = vunpack.c.l.b16 %v395
        %v544 = vunpack.c.l.b16 %v396
        %v545 = vpack.c.b16 %v482, %v481
        %v546 = vpack.c.b16 %v484, %v483
        %v547 = vpack.c.b16 %v486, %v485
        %v548 = vpack.c.b16 %v488, %v487
        %v549 = vpack.c.b16 %v490, %v489
        %v550 = vpack.c.b16 %v492, %v491
        %v551 = vpack.c.b16 %v494, %v493
        %v552 = vpack.c.b16 %v496, %v495
        %v553 = vpack.c.b16 %v498, %v497
        %v554 = vpack.c.b16 %v500, %v499
        %v555 = vpack.c.b16 %v502, %v501
        %v556 = vpack.c.b16 %v504, %v503
        %v557 = vpack.c.b16 %v506, %v505
        %v558 = vpack.c.b16 %v508, %v507
        %v559 = vpack.c.b16 %v510, %v509
        %v560 = vpack.c.b16 %v512, %v511
        %v561 = vpack.c.b16 %v514, %v513
        %v562 = vpack.c.b16 %v516, %v515
        %v563 = vpack.c.b16 %v518, %v517
        %v564 = vpack.c.b16 %v520, %v519
        %v565 = vpack.c.b16 %v522, %v521
        %v566 = vpack.c.b16 %v524, %v523
        %v567 = vpack.c.b16 %v526, %v525
        %v568 = vpack.c.b16 %v528, %v527
        %v569 = vpack.c.b16 %v530, %v529
        %v570 = vpack.c.b16 %v532, %v531
        %v571 = vpack.c.b16 %v534, %v533
        %v572 = vpack.c.b16 %v536, %v535
        %v573 = vpack.c.b16 %v538, %v537
        %v574 = vpack.c.b16 %v540, %v539
        %v575 = vpack.c.b16 %v542, %v541
        %v576 = vpack.c.b16 %v544, %v543
        %609 = vmatprep.subr.bf16.mxu0 0
        %610 = vmatpush1.bf16.msra.mxu0 %v545
        %611 = vmatprep.subr.bf16.mxu0 0
        %612 = vmatpush1.bf16.msra.mxu0 %v546
        %613 = vmatprep.subr.bf16.mxu0 0
        %614 = vmatpush1.bf16.msra.mxu0 %v547
        %615 = vmatprep.subr.bf16.mxu0 0
        %616 = vmatpush1.bf16.msra.mxu0 %v548
        %617 = vmatprep.subr.bf16.mxu0 0
        %618 = vmatpush1.bf16.msra.mxu0 %v549
        %619 = vmatprep.subr.bf16.mxu0 0
        %620 = vmatpush1.bf16.msra.mxu0 %v550
        %621 = vmatprep.subr.bf16.mxu0 0
        %622 = vmatpush1.bf16.msra.mxu0 %v551
        %623 = vmatprep.subr.bf16.mxu0 0
        %624 = vmatpush1.bf16.msra.mxu0 %v552
        %625 = vmatprep.subr.bf16.mxu0 0
        %626 = vmatpush1.bf16.msra.mxu0 %v553
        %627 = vmatprep.subr.bf16.mxu0 0
        %628 = vmatpush1.bf16.msra.mxu0 %v554
        %629 = vmatprep.subr.bf16.mxu0 0
        %630 = vmatpush1.bf16.msra.mxu0 %v555
        %631 = vmatprep.subr.bf16.mxu0 0
        %632 = vmatpush1.bf16.msra.mxu0 %v556
        %633 = vmatprep.subr.bf16.mxu0 0
        %634 = vmatpush1.bf16.msra.mxu0 %v557
        %635 = vmatprep.subr.bf16.mxu0 0
        %636 = vmatpush1.bf16.msra.mxu0 %v558
        %637 = vmatprep.subr.bf16.mxu0 0
        %638 = vmatpush1.bf16.msra.mxu0 %v559
        %639 = vmatprep.subr.bf16.mxu0 0
        %640 = vmatpush1.bf16.msra.mxu0 %v560
        %641 = vmatprep.mubr.bf16.mxu0 %v410
        %642 = vmatmul.mubr.bf16.gmra.mrb[0].mxu0 %v409
        %v643 = vpop.f32.mrb[0].mxu0
        %v644 = vadd.f32 0.0, %v643
        %v645 = vpop.f32.mrb[0].mxu0
        %v646 = vpop.f32.mrb[0].mxu0
        %v647 = vadd.f32 0.0, %v646
        %v648 = vpop.f32.mrb[0].mxu0
        %649 = vdwg.mxu0
        %650 = vmatprep.subr.bf16.mxu0 0
        %651 = vmatpush1.bf16.msra.mxu0 %v561
        %652 = vmatprep.subr.bf16.mxu0 0
        %653 = vmatpush1.bf16.msra.mxu0 %v562
        %654 = vmatprep.subr.bf16.mxu0 0
        %655 = vmatpush1.bf16.msra.mxu0 %v563
        %656 = vmatprep.subr.bf16.mxu0 0
        %657 = vmatpush1.bf16.msra.mxu0 %v564
        %658 = vmatprep.subr.bf16.mxu0 0
        %659 = vmatpush1.bf16.msra.mxu0 %v565
        %660 = vmatprep.subr.bf16.mxu0 0
        %661 = vmatpush1.bf16.msra.mxu0 %v566
        %662 = vmatprep.subr.bf16.mxu0 0
        %663 = vmatpush1.bf16.msra.mxu0 %v567
        %664 = vmatprep.subr.bf16.mxu0 0
        %665 = vmatpush1.bf16.msra.mxu0 %v568
        %666 = vmatprep.subr.bf16.mxu0 0
        %667 = vmatpush1.bf16.msra.mxu0 %v569
        %668 = vmatprep.subr.bf16.mxu0 0
        %669 = vmatpush1.bf16.msra.mxu0 %v570
        %670 = vmatprep.subr.bf16.mxu0 0
        %671 = vmatpush1.bf16.msra.mxu0 %v571
        %672 = vmatprep.subr.bf16.mxu0 0
        %673 = vmatpush1.bf16.msra.mxu0 %v572
        %674 = vmatprep.subr.bf16.mxu0 0
        %675 = vmatpush1.bf16.msra.mxu0 %v573
        %676 = vmatprep.subr.bf16.mxu0 0
        %677 = vmatpush1.bf16.msra.mxu0 %v574
        %678 = vmatprep.subr.bf16.mxu0 0
        %679 = vmatpush1.bf16.msra.mxu0 %v575
        %680 = vmatprep.subr.bf16.mxu0 0
        %681 = vmatpush1.bf16.msra.mxu0 %v576
        %682 = vmatprep.mubr.bf16.mxu0 %v412
        %683 = vmatmul.mubr.bf16.gmra.mrb[0].mxu0 %v411
        %v684 = vpop.f32.mrb[0].mxu0
        %v685 = vadd.f32 %v644, %v684
        %v686 = vpop.f32.mrb[0].mxu0
        %v687 = vpop.f32.mrb[0].mxu0
        %v688 = vadd.f32 %v647, %v687
        %v689 = vpop.f32.mrb[0].mxu0
        %690 = vdwg.mxu0
        %v691 = vadd.f32 %v327, %v685
        %v692 = vadd.f32 %v328, %v688
        %693 = vst [vmem:[#allocation2] sm:$0xff] %v691
        %694 = vst [vmem:[#allocation2 + $0x8] sm:$0xff] %v692
        %p695 = scmp.eq.s32.totalorder %s28, 1
        // Predicated region
        $region57: #{tpu_custom_call.1} parent=39 // pred_check
          %p696 = pneg %p695
        $region58: #{tpu_custom_call.1} parent=39 // pred_check_branch
          %698 = sbr.rel (%p696) target = $region60
        $region59: #{tpu_custom_call.1} parent=39 // pred_region
          %v699 = vld [vmem:[#allocation2] sm:$0xff]
          %v700 = vld [vmem:[#allocation2 + $0x8] sm:$0xff]
          %v701 = vld [vmem:[%s3] sm:$0x1]
          %v703 = vlaneseq
          %v704 = vshrl.u32 %v703, 7
          %v705 = vsub.s32 0, %v704
          %v706 = vrot.slane %v701, %v705
          %v708 = vadd.f32 %v699, %v706
          %v709 = vadd.f32 %v700, %v706
          %vm710 = vcmp.gt.f32.partialorder %v708, 0.0
          %vm711 = vcmp.gt.f32.partialorder %v709, 0.0
          %v712 = vmul.f32 %v708, 0.2
          %v713 = vmul.f32 %v709, 0.2
          %v714 = vsel %vm710, %v708, %v712
          %v715 = vsel %vm711, %v709, %v713
          %v716 = vld [vmem:[%s308] sm:$0xff]
          %v717 = vld [vmem:[%s308 + $0x8] sm:$0xff]
          %719 = vset.pattern.permute.xlu0 0
          %720 = vperm.xlu0 %719, %v716
          %v721 = vpop.permute.xlu0 %720
          %724 = vset.pattern.permute.xlu0 0
          %725 = vperm.xlu0 %724, %v717
          %v726 = vpop.permute.xlu0 %725
          %v728 = vmul.f32 %v721, %v714
          %v729 = vmul.f32 %v726, %v715
          %v730 = vadd.f32 %v728, %v729
          %v731 = vrot.slane %v730, 4
          %v732 = vadd.f32 %v730, %v731
          %v733 = vrot.slane %v732, 2
          %v734 = vadd.f32 %v732, %v733
          %v735 = vrot.slane %v734, 1
          %v736 = vadd.f32 %v734, %v735
          %v737 = vld [vmem:[%s4] sm:$0x1]
          %v738 = vmul.f32 %v736, %v737
          %vm739 = vcmask 1040384
          %v740 = vsel %vm739, %v738, 0.0
          %741 = vadd.xlane.f32.xlu0 %v740
          %v742 = vpop.xlane.xlu0 %741
          %v743 = vrot.slane %v742, 4
          %v744 = vadd.f32 %v742, %v743
          %v745 = vrot.slane %v744, 2
          %v746 = vadd.f32 %v744, %v745
          %v747 = vrot.slane %v746, 1
          %v748 = vadd.f32 %v746, %v747
          %s749 = vtos %v748
          %v750 = vld [vmem:[#allocation8] sm:$0x1]
          %v751 = vstv %s749
          %v752 = vadd.f32 %v750, %v751
          %vm753 = vcmask 0
          %754 = vst.msk [vmem:[#allocation8] sm:$0x1] %vm753, %v752
        $region60: #{tpu_custom_call.1} parent=39 // pred_fallthru
          _
        // Predicated region
        $region61: #{tpu_custom_call.1} parent=39 // pred_check
          %p755 = pneg %p170
        $region62: #{tpu_custom_call.1} parent=39 // pred_check_branch
          %757 = sbr.rel (%p755) target = $region64
        $region63: #{tpu_custom_call.1} parent=39 // pred_region
          %s759 = ssub.s32 16, 16
          %760 = vsyncadd [#allocation5], %s759
          %s762 = sshll.u32 [#allocation8], 4
          %s763 = int_to_ptr.vmem [resolvable:$true] %s762
          %765 = dma.vmem_to_hbm [thread:$0]  %s763, 16, %s5, [#allocation5]
        $region64: #{tpu_custom_call.1} parent=39 // pred_fallthru
          _
        // Predicated region
        $region65: #{tpu_custom_call.1} parent=39 // pred_check
          %p766 = pneg %p170
        $region66: #{tpu_custom_call.1} parent=39 // pred_check_branch
          %768 = sbr.rel (%p766) target = $region68
        $region67: #{tpu_custom_call.1} parent=39 // pred_region
          %769 = dma.done [#allocation5], 16
        $region68: #{tpu_custom_call.1} parent=39 // pred_fallthru
          _
      $region40: #{tpu_custom_call.1} parent=5 // pred_fallthru
        _
      %p770 = scmp.le.s32.totalorder 2, %s18
      // Predicated region
      $region69: #{tpu_custom_call.1} parent=5 // pred_check
        %p771 = pneg %p770
      $region70: #{tpu_custom_call.1} parent=5 // pred_check_branch
        %773 = sbr.rel (%p771) target = $region72
      $region71: #{tpu_custom_call.1} parent=5 // pred_region
        %s774 = ssub.s32 %s18, 2
      $region72: #{tpu_custom_call.1} parent=5 // pred_fallthru
        _
    $region6: #{tpu_custom_call.1} parent=1 // loop_footer
      %s22 = sadd.s32 1, %s18
    $region7: #{tpu_custom_call.1} parent=1 // loop_footer_branch
      %17 = sbr.rel target = $region3
    $region8: #{tpu_custom_call.1} parent=1 // loop_exit
      _
    %775 = vsyncpa [#allocation4], 1
    %s776 = scalar_lea.sflag [#allocation4], 1
    %777 = vsyncpa %s776, 1
    %778 = vsyncpa [#allocation7], 1
    %s779 = scalar_lea.sflag [#allocation7], 1
    %780 = vsyncpa %s779, 1
    %781 = vsyncpa [#allocation5], 1
    %s782 = scalar_lea.sflag [#allocation5], 1
    %783 = vsyncpa %s782, 1

</llo_original>
